<compile_context>
chip_gen: v7x
topology: tpu7x:2x2x1
jax: 0.10.0
libtpu: 0.0.40
codegen_flags: <defaults>
</compile_context>

<pallas_src>
import functools

import jax
import jax.numpy as jnp
from jax import lax
from jax.experimental import pallas as pl
from jax.experimental.pallas import tpu as pltpu

config = {
    "batch_size": 4,
    "half_window": 2,
    "embed_dim": 25,
    "hidden_dim": 25,
    "num_classes": 2,
    "freeze_embeddings": False,
}


def _round_up(x, m):
    return (x + m - 1) // m * m


def _ww_kernel(ids_ref, wf_ref, b1_ref, w2_ref, b2_ref, o_ref, x_ref,
               *, num_slots, vp, num_classes):
    """One-hot slab -> fused (embed+W1) long-K matmul -> tanh -> W2 -> log_softmax."""
    ids = ids_ref[...]                                   # (TM, S) int32
    cdt = wf_ref.dtype                                   # MXU operand dtype
    tm = ids.shape[0]

    # ---- build the lane-dense one-hot slab directly in VMEM scratch --------
    vocab_iota = lax.broadcasted_iota(jnp.int32, (tm, vp), 1)   # hoisted once
    for s in range(num_slots):                           # S is tiny & static
        onehot = (ids[:, s:s + 1] == vocab_iota).astype(cdt)    # (TM, Vp)
        x_ref[:, s * vp:(s + 1) * vp] = onehot           # static 128-aligned store

    # ---- hidden layer: ONE long-K matmul against Wf = stack_s(E @ W1_s) ----
    h = jnp.tanh(
        jnp.dot(x_ref[...], wf_ref[...], preferred_element_type=jnp.float32)
        + b1_ref[...])                                   # (TM, Hp) f32

    # ---- output layer: class dim zero-padded to Cp=128 (lane-dense) --------
    logits = (jnp.dot(h.astype(cdt), w2_ref[...],
                      preferred_element_type=jnp.float32)
              + b2_ref[...])                             # (TM, Cp) f32

    cp = logits.shape[-1]
    lane = lax.broadcasted_iota(jnp.int32, (tm, cp), 1)
    if num_classes == 2:
        # 2-class closed form: log p0 = -softplus(d), log p1 = d - softplus(d)
        # -> no cross-lane (XLU) reductions; pure VPU/EUP.
        d = logits[:, 1:2] - logits[:, 0:1]              # (TM, 1)  (l1 - l0)
        sp = jnp.maximum(d, 0.0) + jnp.log(1.0 + jnp.exp(-jnp.abs(d)))
        o_ref[...] = jnp.where(lane == 0, -sp, d - sp)   # lane-dense store
    else:
        # general fallback: masked, lane-dense logsumexp over padded lanes
        masked = jnp.where(lane < num_classes, logits, -1e30)
        m = jnp.max(masked, axis=-1, keepdims=True)
        z = logits - m
        e = jnp.where(lane < num_classes, jnp.exp(z), 0.0)
        lse = jnp.log(jnp.sum(e, axis=-1, keepdims=True))
        o_ref[...] = jnp.where(lane < num_classes, z - lse, 0.0)


def prepare_params(embed_w, w1, b1, w2, b2, window_size,
                   *, mxu_dtype=jnp.bfloat16):
    """Fold the embedding table into W1 per window slot and zero-pad lane-dense.

    Run ONCE at init; the returned params are reused across forward calls."""
    V, D = embed_w.shape
    H = w1.shape[1]
    C = w2.shape[1]
    S = window_size
    Vp = _round_up(V, 128)
    Hp = _round_up(H, 128)
    Cp = _round_up(C, 128)

    # Wf[s] = E @ W1_s : row (s, v) is the hidden-layer contribution of token v
    # in window slot s; the in-kernel one-hot selects it exactly.
    w1_slots = w1.reshape(S, D, H)
    wf = jnp.einsum("vd,sdh->svh", embed_w, w1_slots,
                    precision=jax.lax.Precision.HIGHEST)        # (S, V, H) f32
    wf_p = (jnp.zeros((S, Vp, Hp), jnp.float32).at[:, :V, :H].set(wf)
            .reshape(S * Vp, Hp).astype(mxu_dtype))
    w2_p = jnp.zeros((Hp, Cp), jnp.float32).at[:H, :C].set(w2).astype(mxu_dtype)
    b1_p = jnp.zeros((1, Hp), jnp.float32).at[0, :H].set(b1)
    b2_p = jnp.zeros((1, Cp), jnp.float32).at[0, :C].set(b2)
    return {"wf": wf_p, "b1": b1_p, "w2": w2_p, "b2": b2_p,
            "window_size": S, "num_classes": C,
            "vp": Vp, "hp": Hp, "cp": Cp}


def word_window_classifier_fwd(inputs, params, *, tile_m=1024):
    """inputs: (B, L) int token ids -> (B, L - S + 1, C) f32 log-probs."""
    B, L = inputs.shape
    S = params["window_size"]
    C = params["num_classes"]
    Vp, Hp, Cp = params["vp"], params["hp"], params["cp"]
    Lt = L - S + 1

    # cheap int-only window unfold (the embedding gather itself is fused in-kernel)
    win_idx = jnp.arange(Lt)[:, None] + jnp.arange(S)[None, :]
    ids = inputs[:, win_idx].reshape(B * Lt, S).astype(jnp.int32)   # (M, S)

    M = B * Lt
    # 16-row granule: valid for the int32/f32 blocks (8-sublane) and for the
    # bf16 one-hot scratch slab (16-sublane packing).
    granule = 16
    TM = min(tile_m, _round_up(M, granule))
    if -(-M // TM) < 2:
        # ensure >= 2 grid steps so both v7x TensorCores get work
        TM = max(granule, _round_up(-(-M // 2), granule))
    Mp = _round_up(M, TM)
    ids = jnp.pad(ids, ((0, Mp - M), (0, 0)))            # padded rows -> token 0

    kernel = functools.partial(_ww_kernel, num_slots=S, vp=Vp, num_classes=C)

    out = pl.pallas_call(
        kernel,
        out_shape=jax.ShapeDtypeStruct((Mp, Cp), jnp.float32),
        grid=(Mp // TM,),
        in_specs=[
            pl.BlockSpec((TM, S), lambda i: (i, 0)),        # token-window ids
            pl.BlockSpec((S * Vp, Hp), lambda i: (0, 0)),   # Wf = E@W1 (resident)
            pl.BlockSpec((1, Hp), lambda i: (0, 0)),        # b1
            pl.BlockSpec((Hp, Cp), lambda i: (0, 0)),       # W2 (resident)
            pl.BlockSpec((1, Cp), lambda i: (0, 0)),        # b2
        ],
        out_specs=pl.BlockSpec((TM, Cp), lambda i: (i, 0)),  # lane-dense store
        scratch_shapes=[pltpu.VMEM((TM, S * Vp), params["wf"].dtype)],
        compiler_params=pltpu.CompilerParams(
            dimension_semantics=("parallel",)),
    )(ids, params["wf"], params["b1"], params["w2"], params["b2"])

    return out[:M, :C].reshape(B, Lt, C)


def _reference_fwd(inputs, embed_w, w1, b1, w2, b2, window_size):
    """Pure-JAX reference of the PyTorch forward (for correctness check)."""
    B, L = inputs.shape
    Lt = L - window_size + 1
    win_idx = jnp.arange(Lt)[:, None] + jnp.arange(window_size)[None, :]
    emb = embed_w[inputs[:, win_idx]].reshape(B, Lt, -1)
    h = jnp.tanh(jnp.dot(emb, w1, precision=jax.lax.Precision.HIGHEST) + b1)
    logits = jnp.dot(h, w2, precision=jax.lax.Precision.HIGHEST) + b2
    return jax.nn.log_softmax(logits, axis=2)


if __name__ == "__main__":
    key = jax.random.PRNGKey(0)
    k_emb, k_w1, k_b1, k_w2, k_b2, k_in = jax.random.split(key, 6)

    vocab_size = 50
    pad_idx = 0
    window_size = 2 * config["half_window"] + 1                # 5
    D = config["embed_dim"]                                    # 25
    H = config["hidden_dim"]                                   # 25
    C = config["num_classes"]                                  # 2
    B = config["batch_size"]                                   # 4
    L = 12                                                     # padded sentence length

    # deterministic parameter init (nn.Embedding padding row is zeros)
    embed_w = 0.1 * jax.random.normal(k_emb, (vocab_size, D), jnp.float32)
    embed_w = embed_w.at[pad_idx].set(0.0)
    w1 = 0.1 * jax.random.normal(k_w1, (window_size * D, H), jnp.float32)
    b1 = 0.1 * jax.random.normal(k_b1, (H,), jnp.float32)
    w2 = 0.1 * jax.random.normal(k_w2, (H, C), jnp.float32)
    b2 = 0.1 * jax.random.normal(k_b2, (C,), jnp.float32)

    inputs = jax.random.randint(k_in, (B, L), 0, vocab_size, jnp.int32)

    ref = _reference_fwd(inputs, embed_w, w1, b1, w2, b2, window_size)

    # exact-semantics path (f32 MXU operands) — tight tolerance vs f32 reference
    params_f32 = prepare_params(embed_w, w1, b1, w2, b2, window_size,
                                mxu_dtype=jnp.float32)
    out_f32 = jax.block_until_ready(
        word_window_classifier_fwd(inputs, params_f32))
    assert out_f32.shape == (B, L - window_size + 1, C)
    assert jnp.allclose(out_f32, ref, atol=1e-5, rtol=1e-5)

    # default fast path: bf16 MXU operands (f32 accumulation, f32 elementwise)
    # — error comes only from bf16 rounding of the fused weights.
    params_bf16 = prepare_params(embed_w, w1, b1, w2, b2, window_size)
    out_bf16 = jax.block_until_ready(
        word_window_classifier_fwd(inputs, params_bf16))
    assert out_bf16.shape == (B, L - window_size + 1, C)
    assert jnp.allclose(out_bf16, ref, atol=5e-2, rtol=5e-2)

    print("KERNEL_OK")
</pallas_src>

<mosaic_0001>
module attributes {stable_mosaic.version = 11 : i64} {
  func.func @_ww_kernel(%arg0: i32, %arg1: memref<16x5xi32, #tpu.memory_space<vmem>>, %arg2: memref<640x128xf32, #tpu.memory_space<vmem>>, %arg3: memref<1x128xf32, #tpu.memory_space<vmem>>, %arg4: memref<128x128xf32, #tpu.memory_space<vmem>>, %arg5: memref<1x128xf32, #tpu.memory_space<vmem>>, %arg6: memref<16x128xf32, #tpu.memory_space<vmem>>, %arg7: memref<16x640xf32, #tpu.memory_space<vmem>>) attributes {dimension_semantics = [#tpu.dimension_semantics<parallel>], iteration_bounds = array<i64: 2>, scalar_prefetch = 0 : i64, scratch_operands = 1 : i64, tpu.core_type = #tpu.core_type<tc>, window_params = [{transform_indices = @transform_0, window_bounds = array<i64: 16, 5>}, {pipeline_mode = #tpu.pipeline_mode<synchronous>, transform_indices = @transform_1, window_bounds = array<i64: 640, 128>}, {pipeline_mode = #tpu.pipeline_mode<synchronous>, transform_indices = @transform_2, window_bounds = array<i64: 1, 128>}, {pipeline_mode = #tpu.pipeline_mode<synchronous>, transform_indices = @transform_3, window_bounds = array<i64: 128, 128>}, {pipeline_mode = #tpu.pipeline_mode<synchronous>, transform_indices = @transform_4, window_bounds = array<i64: 1, 128>}, {transform_indices = @transform_5, window_bounds = array<i64: 16, 128>}]} {
    %c0 = arith.constant 0 : index
    %c0_0 = arith.constant 0 : index
    %0 = vector.load %arg1[%c0, %c0_0] : memref<16x5xi32, #tpu.memory_space<vmem>>, vector<16x5xi32>
    %1 = tpu.iota {dimensions = array<i32: 1>} : vector<16x128xi32>
    %2 = vector.extract_strided_slice %0 {offsets = [0, 0], sizes = [16, 1], strides = [1, 1]} : vector<16x5xi32> to vector<16x1xi32>
    %3 = vector.broadcast %2 : vector<16x1xi32> to vector<16x128xi32>
    %4 = arith.cmpi eq, %3, %1 : vector<16x128xi32>
    %5 = arith.extui %4 : vector<16x128xi1> to vector<16x128xi32>
    %6 = arith.sitofp %5 : vector<16x128xi32> to vector<16x128xf32>
    %c0_1 = arith.constant 0 : index
    %c0_2 = arith.constant 0 : index
    %7 = vector.load %arg7[%c0_1, %c0_2] : memref<16x640xf32, #tpu.memory_space<vmem>>, vector<16x128xf32>
    tpu.vector_store %arg7[%c0_1, %c0_2], %6 {strides = array<i32>} : memref<16x640xf32, #tpu.memory_space<vmem>>, vector<16x128xf32>,
    %8 = vector.extract_strided_slice %0 {offsets = [0, 1], sizes = [16, 1], strides = [1, 1]} : vector<16x5xi32> to vector<16x1xi32>
    %9 = vector.broadcast %8 : vector<16x1xi32> to vector<16x128xi32>
    %10 = arith.cmpi eq, %9, %1 : vector<16x128xi32>
    %11 = arith.extui %10 : vector<16x128xi1> to vector<16x128xi32>
    %12 = arith.sitofp %11 : vector<16x128xi32> to vector<16x128xf32>
    %c0_3 = arith.constant 0 : index
    %c128 = arith.constant 128 : index
    %13 = vector.load %arg7[%c0_3, %c128] : memref<16x640xf32, #tpu.memory_space<vmem>>, vector<16x128xf32>
    tpu.vector_store %arg7[%c0_3, %c128], %12 {strides = array<i32>} : memref<16x640xf32, #tpu.memory_space<vmem>>, vector<16x128xf32>,
    %14 = vector.extract_strided_slice %0 {offsets = [0, 2], sizes = [16, 1], strides = [1, 1]} : vector<16x5xi32> to vector<16x1xi32>
    %15 = vector.broadcast %14 : vector<16x1xi32> to vector<16x128xi32>
    %16 = arith.cmpi eq, %15, %1 : vector<16x128xi32>
    %17 = arith.extui %16 : vector<16x128xi1> to vector<16x128xi32>
    %18 = arith.sitofp %17 : vector<16x128xi32> to vector<16x128xf32>
    %c0_4 = arith.constant 0 : index
    %c256 = arith.constant 256 : index
    %19 = vector.load %arg7[%c0_4, %c256] : memref<16x640xf32, #tpu.memory_space<vmem>>, vector<16x128xf32>
    tpu.vector_store %arg7[%c0_4, %c256], %18 {strides = array<i32>} : memref<16x640xf32, #tpu.memory_space<vmem>>, vector<16x128xf32>,
    %20 = vector.extract_strided_slice %0 {offsets = [0, 3], sizes = [16, 1], strides = [1, 1]} : vector<16x5xi32> to vector<16x1xi32>
    %21 = vector.broadcast %20 : vector<16x1xi32> to vector<16x128xi32>
    %22 = arith.cmpi eq, %21, %1 : vector<16x128xi32>
    %23 = arith.extui %22 : vector<16x128xi1> to vector<16x128xi32>
    %24 = arith.sitofp %23 : vector<16x128xi32> to vector<16x128xf32>
    %c0_5 = arith.constant 0 : index
    %c384 = arith.constant 384 : index
    %25 = vector.load %arg7[%c0_5, %c384] : memref<16x640xf32, #tpu.memory_space<vmem>>, vector<16x128xf32>
    tpu.vector_store %arg7[%c0_5, %c384], %24 {strides = array<i32>} : memref<16x640xf32, #tpu.memory_space<vmem>>, vector<16x128xf32>,
    %26 = vector.extract_strided_slice %0 {offsets = [0, 4], sizes = [16, 1], strides = [1, 1]} : vector<16x5xi32> to vector<16x1xi32>
    %27 = vector.broadcast %26 : vector<16x1xi32> to vector<16x128xi32>
    %28 = arith.cmpi eq, %27, %1 : vector<16x128xi32>
    %29 = arith.extui %28 : vector<16x128xi1> to vector<16x128xi32>
    %30 = arith.sitofp %29 : vector<16x128xi32> to vector<16x128xf32>
    %c0_6 = arith.constant 0 : index
    %c512 = arith.constant 512 : index
    %31 = vector.load %arg7[%c0_6, %c512] : memref<16x640xf32, #tpu.memory_space<vmem>>, vector<16x128xf32>
    tpu.vector_store %arg7[%c0_6, %c512], %30 {strides = array<i32>} : memref<16x640xf32, #tpu.memory_space<vmem>>, vector<16x128xf32>,
    %c0_7 = arith.constant 0 : index
    %c0_8 = arith.constant 0 : index
    %32 = vector.load %arg7[%c0_7, %c0_8] : memref<16x640xf32, #tpu.memory_space<vmem>>, vector<16x640xf32>
    %c0_9 = arith.constant 0 : index
    %c0_10 = arith.constant 0 : index
    %33 = vector.load %arg2[%c0_9, %c0_10] : memref<640x128xf32, #tpu.memory_space<vmem>>, vector<640x128xf32>
    %cst = arith.constant dense<0.000000e+00> : vector<16x128xf32>
    %34 = tpu.matmul %32, %33, %cst {dimension_numbers = #tpu.dot_dimension_numbers<[1], [0], [0], [1], [0, 0, 1, 1], [], []>} : vector<16x640xf32>, vector<640x128xf32>, vector<16x128xf32> -> vector<16x128xf32>
    %c0_11 = arith.constant 0 : index
    %c0_12 = arith.constant 0 : index
    %35 = vector.load %arg3[%c0_11, %c0_12] : memref<1x128xf32, #tpu.memory_space<vmem>>, vector<1x128xf32>
    %36 = vector.broadcast %35 : vector<1x128xf32> to vector<16x128xf32>
    %37 = arith.addf %34, %36 : vector<16x128xf32>
    %38 = math.tanh %37 : vector<16x128xf32>
    %c0_13 = arith.constant 0 : index
    %c0_14 = arith.constant 0 : index
    %39 = vector.load %arg4[%c0_13, %c0_14] : memref<128x128xf32, #tpu.memory_space<vmem>>, vector<128x128xf32>
    %cst_15 = arith.constant dense<0.000000e+00> : vector<16x128xf32>
    %40 = tpu.matmul %38, %39, %cst_15 {dimension_numbers = #tpu.dot_dimension_numbers<[1], [0], [0], [1], [0, 0, 1, 1], [], []>} : vector<16x128xf32>, vector<128x128xf32>, vector<16x128xf32> -> vector<16x128xf32>
    %c0_16 = arith.constant 0 : index
    %c0_17 = arith.constant 0 : index
    %41 = vector.load %arg5[%c0_16, %c0_17] : memref<1x128xf32, #tpu.memory_space<vmem>>, vector<1x128xf32>
    %42 = vector.broadcast %41 : vector<1x128xf32> to vector<16x128xf32>
    %43 = arith.addf %40, %42 : vector<16x128xf32>
    %44 = tpu.iota {dimensions = array<i32: 1>} : vector<16x128xi32>
    %45 = vector.extract_strided_slice %43 {offsets = [0, 1], sizes = [16, 1], strides = [1, 1]} : vector<16x128xf32> to vector<16x1xf32>
    %46 = vector.extract_strided_slice %43 {offsets = [0, 0], sizes = [16, 1], strides = [1, 1]} : vector<16x128xf32> to vector<16x1xf32>
    %47 = arith.subf %45, %46 : vector<16x1xf32>
    %cst_18 = arith.constant 0.000000e+00 : f32
    %48 = vector.broadcast %cst_18 : f32 to vector<16x1xf32>
    %49 = arith.maximumf %47, %48 : vector<16x1xf32>
    %50 = math.absf %47 : vector<16x1xf32>
    %cst_19 = arith.constant 0.000000e+00 : f32
    %51 = vector.broadcast %cst_19 : f32 to vector<16x1xf32>
    %52 = arith.subf %51, %50 : vector<16x1xf32>
    %53 = math.exp %52 : vector<16x1xf32>
    %cst_20 = arith.constant 1.000000e+00 : f32
    %54 = vector.broadcast %cst_20 : f32 to vector<16x1xf32>
    %55 = arith.addf %54, %53 : vector<16x1xf32>
    %56 = math.log %55 : vector<16x1xf32>
    %57 = arith.addf %49, %56 : vector<16x1xf32>
    %c0_i32 = arith.constant 0 : i32
    %58 = vector.broadcast %c0_i32 : i32 to vector<16x128xi32>
    %59 = arith.cmpi eq, %44, %58 : vector<16x128xi32>
    %cst_21 = arith.constant 0.000000e+00 : f32
    %60 = vector.broadcast %cst_21 : f32 to vector<16x1xf32>
    %61 = arith.subf %60, %57 : vector<16x1xf32>
    %62 = arith.subf %47, %57 : vector<16x1xf32>
    %63 = vector.shape_cast %61 : vector<16x1xf32> to vector<16x1xf32>
    %64 = vector.broadcast %63 : vector<16x1xf32> to vector<16x128xf32>
    %65 = vector.shape_cast %62 : vector<16x1xf32> to vector<16x1xf32>
    %66 = vector.broadcast %65 : vector<16x1xf32> to vector<16x128xf32>
    %67 = arith.select %59, %64, %66 : vector<16x128xi1>, vector<16x128xf32>
    %c0_22 = arith.constant 0 : index
    %c0_23 = arith.constant 0 : index
    %68 = vector.load %arg6[%c0_22, %c0_23] : memref<16x128xf32, #tpu.memory_space<vmem>>, vector<16x128xf32>
    tpu.vector_store %arg6[%c0_22, %c0_23], %67 {strides = array<i32>} : memref<16x128xf32, #tpu.memory_space<vmem>>, vector<16x128xf32>,
    return
  }
  func.func @transform_0(%arg0: i32) -> (i32, i32) {
    %c0_i32 = arith.constant 0 : i32
    %c0_i32_0 = arith.constant 0 : i32
    return %arg0, %c0_i32 : i32, i32
  }
  func.func @transform_1(%arg0: i32) -> (i32, i32) {
    %c0_i32 = arith.constant 0 : i32
    %c0_i32_0 = arith.constant 0 : i32
    %c0_i32_1 = arith.constant 0 : i32
    return %c0_i32, %c0_i32_0 : i32, i32
  }
  func.func @transform_2(%arg0: i32) -> (i32, i32) {
    %c0_i32 = arith.constant 0 : i32
    %c0_i32_0 = arith.constant 0 : i32
    %c0_i32_1 = arith.constant 0 : i32
    return %c0_i32, %c0_i32_0 : i32, i32
  }
  func.func @transform_3(%arg0: i32) -> (i32, i32) {
    %c0_i32 = arith.constant 0 : i32
    %c0_i32_0 = arith.constant 0 : i32
    %c0_i32_1 = arith.constant 0 : i32
    return %c0_i32, %c0_i32_0 : i32, i32
  }
  func.func @transform_4(%arg0: i32) -> (i32, i32) {
    %c0_i32 = arith.constant 0 : i32
    %c0_i32_0 = arith.constant 0 : i32
    %c0_i32_1 = arith.constant 0 : i32
    return %c0_i32, %c0_i32_0 : i32, i32
  }
  func.func @transform_5(%arg0: i32) -> (i32, i32) {
    %c0_i32 = arith.constant 0 : i32
    %c0_i32_0 = arith.constant 0 : i32
    return %arg0, %c0_i32 : i32, i32
  }
}

</mosaic_0001>

<llo_original>
// kernel: tpu_custom_call.1
$region0: #{tpu_custom_call.1}
  #allocation0 [shape = 'u32[]', space=smem, size = 0x4, offset = 0x4, fixed_abs, tag = 'smem constant byte address 0x4 - core index']
  #allocation1 [shape = 'u32[144,128]{1,0:T(1,128)}', space=vmem, size = 0x12000, scoped, tag = 'internal scratch']
  #allocation2 [shape = 'f32[16,640]{1,0:T(8,128)}', space=vmem, size = 0xa000, scoped, tag = 'scratch operand']
  %s0 = inlined_call_operand.vmem [shape: s32[32,5], index: 0, kind: input, shape index: {}]
  %s1 = inlined_call_operand.hbm [shape: f32[640,128], index: 1, kind: input, shape index: {}]
  %s2 = inlined_call_operand.vmem [shape: f32[1,128], index: 2, kind: input, shape index: {}]
  %s3 = inlined_call_operand.hbm [shape: f32[128,128], index: 3, kind: input, shape index: {}]
  %s4 = inlined_call_operand.vmem [shape: f32[1,128], index: 4, kind: input, shape index: {}]
  %s5 = inlined_call_operand.hbm [shape: f32[32,128], index: 5, kind: output, shape index: {}]
  %s6 = sld [smem:[#allocation0]]
  $region61: #{tpu_custom_call.1} parent=0
    _
  %s8 = ssub.s32 1, %s6
  %s9 = scalar_select 0, %s8, %s6
  $region1: #{tpu_custom_call.1} parent=0
    #allocation3 [shape = 'u8[327680]{0}', space=vmem, size = 0x50000, scoped, tag = 'input window, operand 1, single buffered']
    #allocation4 [shape = 's32[2]{0}', space=sflag, size = 0x8, scoped, tag = 'scoped memory for tpu_custom_call.1']
    #allocation5 [shape = 's32[2]{0}', space=sflag, size = 0x8, scoped, tag = 'scoped memory for tpu_custom_call.1']
    #allocation6 [shape = 'u8[65536]{0}', space=vmem, size = 0x10000, scoped, tag = 'input window, operand 3, single buffered']
    #allocation7 [shape = 's32[1]{0}', space=sflag, size = 0x4, scoped, tag = 'scoped memory for tpu_custom_call.1']
    #allocation8 [shape = 'u8[16384]{0}', space=vmem, size = 0x4000, scoped, tag = 'output window, operand 0']
    %10 = vsyncpa [#allocation4], 0
    %11 = vsyncpa [#allocation7], 0
    %12 = vsyncpa [#allocation5], 0
    %s13 = scalar_lea.sflag [#allocation5], 1
    %14 = vsyncpa %s13, 0
    loop: start=0, step=1, limit=4
    $region2: #{tpu_custom_call.1} parent=1 // loop_pre_header
      _
    $region3: #{tpu_custom_call.1} parent=1 // loop_header
      %s16 = sphi 0, %s20
      %p17 = scmp.ge.s32.totalorder %s16, 4
      %s26 = sphi 0, %s28
      %s29 = sphi 0, %s26
      %s30 = sphi 0, %s29
      %s46 = sphi 0, %s30
      %s50 = sphi 0, %s50
      %s52 = sphi 0, %s50
      %s53 = sphi 0, %s52
      %s67 = sphi 0, %s53
      %s71 = sphi 0, %s71
      %s73 = sphi 0, %s71
      %s74 = sphi 0, %s73
      %s88 = sphi 0, %s74
      %s92 = sphi 0, %s92
      %s94 = sphi 0, %s92
      %s95 = sphi 0, %s94
      %s109 = sphi 0, %s95
      %s113 = sphi 0, %s113
      %s115 = sphi 0, %s113
      %s116 = sphi 0, %s115
      %s130 = sphi 0, %s116
      %s136 = sphi 0, %s138
      %s139 = sphi 0, %s136
      %s140 = sphi 0, %s139
      %s156 = sphi 0, %s140
    $region4: #{tpu_custom_call.1} parent=1 // loop_header_branch
      %19 = sbr.rel (%p17) target = $region8
    $region5: #{tpu_custom_call.1} parent=1 // loop_body
      %s21 = ssub.s32 %s16, 1
      %s22 = ssub.s32 %s16, 2
      %s23 = sadd.s32 %s16, 1
      %s24 = ssub.s32 %s16, %s23
      %p25 = scmp.eq.s32.totalorder %s24, 0
      %s27 = sadd.s32 %s26, 1
      %s28 = scalar_select %p25, %s26, %s27
      %p31 = pneg %p25
      %p32 = scmp.eq.s32.totalorder %s16, 1
      %p33 = por %p31, %p32
      %p34 = scmp.ne.s32.totalorder %s26, %s29
      %p35 = scmp.eq.s32.totalorder %s16, 0
      %p36 = por %p34, %p35
      %p37 = scmp.ne.s32.totalorder %s26, %s29
      %p38 = scmp.eq.s32.totalorder %s21, 1
      %p39 = por %p37, %p38
      %p40 = scmp.ne.s32.totalorder %s29, %s30
      %p41 = scmp.eq.s32.totalorder %s21, 0
      %p42 = por %p40, %p41
      %p43 = scmp.ne.s32.totalorder %s29, %s30
      %p44 = scmp.eq.s32.totalorder %s22, 1
      %p45 = por %p43, %p44
      %p47 = scmp.ne.s32.totalorder %s30, %s46
      %p48 = scmp.eq.s32.totalorder %s22, 0
      %p49 = por %p47, %p48
      %s51 = sadd.s32 %s50, 1
      %p54 = scmp.eq.s32.totalorder %s16, 1
      %p55 = scmp.ne.s32.totalorder %s50, %s52
      %p56 = scmp.eq.s32.totalorder %s16, 0
      %p57 = por %p55, %p56
      %p58 = scmp.ne.s32.totalorder %s50, %s52
      %p59 = scmp.eq.s32.totalorder %s21, 1
      %p60 = por %p58, %p59
      %p61 = scmp.ne.s32.totalorder %s52, %s53
      %p62 = scmp.eq.s32.totalorder %s21, 0
      %p63 = por %p61, %p62
      %p64 = scmp.ne.s32.totalorder %s52, %s53
      %p65 = scmp.eq.s32.totalorder %s22, 1
      %p66 = por %p64, %p65
      %p68 = scmp.ne.s32.totalorder %s53, %s67
      %p69 = scmp.eq.s32.totalorder %s22, 0
      %p70 = por %p68, %p69
      %s72 = sadd.s32 %s71, 1
      %p75 = scmp.eq.s32.totalorder %s16, 1
      %p76 = scmp.ne.s32.totalorder %s71, %s73
      %p77 = scmp.eq.s32.totalorder %s16, 0
      %p78 = por %p76, %p77
      %p79 = scmp.ne.s32.totalorder %s71, %s73
      %p80 = scmp.eq.s32.totalorder %s21, 1
      %p81 = por %p79, %p80
      %p82 = scmp.ne.s32.totalorder %s73, %s74
      %p83 = scmp.eq.s32.totalorder %s21, 0
      %p84 = por %p82, %p83
      %p85 = scmp.ne.s32.totalorder %s73, %s74
      %p86 = scmp.eq.s32.totalorder %s22, 1
      %p87 = por %p85, %p86
      %p89 = scmp.ne.s32.totalorder %s74, %s88
      %p90 = scmp.eq.s32.totalorder %s22, 0
      %p91 = por %p89, %p90
      %s93 = sadd.s32 %s92, 1
      %p96 = scmp.eq.s32.totalorder %s16, 1
      %p97 = scmp.ne.s32.totalorder %s92, %s94
      %p98 = scmp.eq.s32.totalorder %s16, 0
      %p99 = por %p97, %p98
      %p100 = scmp.ne.s32.totalorder %s92, %s94
      %p101 = scmp.eq.s32.totalorder %s21, 1
      %p102 = por %p100, %p101
      %p103 = scmp.ne.s32.totalorder %s94, %s95
      %p104 = scmp.eq.s32.totalorder %s21, 0
      %p105 = por %p103, %p104
      %p106 = scmp.ne.s32.totalorder %s94, %s95
      %p107 = scmp.eq.s32.totalorder %s22, 1
      %p108 = por %p106, %p107
      %p110 = scmp.ne.s32.totalorder %s95, %s109
      %p111 = scmp.eq.s32.totalorder %s22, 0
      %p112 = por %p110, %p111
      %s114 = sadd.s32 %s113, 1
      %p117 = scmp.eq.s32.totalorder %s16, 1
      %p118 = scmp.ne.s32.totalorder %s113, %s115
      %p119 = scmp.eq.s32.totalorder %s16, 0
      %p120 = por %p118, %p119
      %p121 = scmp.ne.s32.totalorder %s113, %s115
      %p122 = scmp.eq.s32.totalorder %s21, 1
      %p123 = por %p121, %p122
      %p124 = scmp.ne.s32.totalorder %s115, %s116
      %p125 = scmp.eq.s32.totalorder %s21, 0
      %p126 = por %p124, %p125
      %p127 = scmp.ne.s32.totalorder %s115, %s116
      %p128 = scmp.eq.s32.totalorder %s22, 1
      %p129 = por %p127, %p128
      %p131 = scmp.ne.s32.totalorder %s116, %s130
      %p132 = scmp.eq.s32.totalorder %s22, 0
      %p133 = por %p131, %p132
      %s134 = ssub.s32 %s16, %s23
      %p135 = scmp.eq.s32.totalorder %s134, 0
      %s137 = sadd.s32 %s136, 1
      %s138 = scalar_select %p135, %s136, %s137
      %p141 = pneg %p135
      %p142 = scmp.eq.s32.totalorder %s16, 1
      %p143 = por %p141, %p142
      %p144 = scmp.ne.s32.totalorder %s136, %s139
      %p145 = scmp.eq.s32.totalorder %s16, 0
      %p146 = por %p144, %p145
      %p147 = scmp.ne.s32.totalorder %s136, %s139
      %p148 = scmp.eq.s32.totalorder %s21, 1
      %p149 = por %p147, %p148
      %p150 = scmp.ne.s32.totalorder %s139, %s140
      %p151 = scmp.eq.s32.totalorder %s21, 0
      %p152 = por %p150, %p151
      %p153 = scmp.ne.s32.totalorder %s139, %s140
      %p154 = scmp.eq.s32.totalorder %s22, 1
      %p155 = por %p153, %p154
      %p157 = scmp.ne.s32.totalorder %s140, %s156
      %p158 = scmp.eq.s32.totalorder %s22, 0
      %p159 = por %p157, %p158
      %p160 = scmp.le.s32.totalorder 1, %s16
      %p161 = scmp.lt.s32.totalorder %s16, 3
      %p162 = pnand %p160, %p161
      %p163 = pneg %p162
      // Predicated region
      $region9: #{tpu_custom_call.1} parent=5 // pred_check
        _
      $region10: #{tpu_custom_call.1} parent=5 // pred_check_branch
        %165 = sbr.rel (%p162) target = $region12
      $region11: #{tpu_custom_call.1} parent=5 // pred_region
        %s166 = ssub.s32 %s16, 1
        // Predicated region
        $region13: #{tpu_custom_call.1} parent=11 // pred_check
          %p167 = pneg %p63
        $region14: #{tpu_custom_call.1} parent=11 // pred_check_branch
          %169 = sbr.rel (%p167) target = $region16
        $region15: #{tpu_custom_call.1} parent=11 // pred_region
          %s171 = ssub.s32 10240, 10240
          %172 = vsyncadd [#allocation4], %s171
          %s173 = sshll.u32 [#allocation3], 4
          %s174 = int_to_ptr.vmem [resolvable:$true] %s173
          %179 = dma.hbm_to_vmem [thread:$0]  %s1, 10240, %s174, [#allocation4], 128, 128, 8
        $region16: #{tpu_custom_call.1} parent=11 // pred_fallthru
          _
        // Predicated region
        $region17: #{tpu_custom_call.1} parent=11 // pred_check
          %p180 = pneg %p84
        $region18: #{tpu_custom_call.1} parent=11 // pred_check_branch
          %182 = sbr.rel (%p180) target = $region20
        $region19: #{tpu_custom_call.1} parent=11 // pred_region
          _
        $region20: #{tpu_custom_call.1} parent=11 // pred_fallthru
          _
        // Predicated region
        $region21: #{tpu_custom_call.1} parent=11 // pred_check
          %p183 = pneg %p105
        $region22: #{tpu_custom_call.1} parent=11 // pred_check_branch
          %185 = sbr.rel (%p183) target = $region24
        $region23: #{tpu_custom_call.1} parent=11 // pred_region
          %s187 = ssub.s32 2048, 2048
          %188 = vsyncadd [#allocation7], %s187
          %s189 = sshll.u32 [#allocation6], 4
          %s190 = int_to_ptr.vmem [resolvable:$true] %s189
          %195 = dma.hbm_to_vmem [thread:$0]  %s3, 2048, %s190, [#allocation7], 128, 128, 8
        $region24: #{tpu_custom_call.1} parent=11 // pred_fallthru
          _
        // Predicated region
        $region25: #{tpu_custom_call.1} parent=11 // pred_check
          %p196 = pneg %p126
        $region26: #{tpu_custom_call.1} parent=11 // pred_check_branch
          %198 = sbr.rel (%p196) target = $region28
        $region27: #{tpu_custom_call.1} parent=11 // pred_region
          _
        $region28: #{tpu_custom_call.1} parent=11 // pred_fallthru
          _
      $region12: #{tpu_custom_call.1} parent=5 // pred_fallthru
        _
      %p199 = scmp.lt.s32.totalorder %s16, 2
      // Predicated region
      $region29: #{tpu_custom_call.1} parent=5 // pred_check
        %p200 = pneg %p199
      $region30: #{tpu_custom_call.1} parent=5 // pred_check_branch
        %202 = sbr.rel (%p200) target = $region32
      $region31: #{tpu_custom_call.1} parent=5 // pred_region
        // Predicated region
        $region33: #{tpu_custom_call.1} parent=31 // pred_check
          %p203 = pneg %p36
        $region34: #{tpu_custom_call.1} parent=31 // pred_check_branch
          %205 = sbr.rel (%p203) target = $region36
        $region35: #{tpu_custom_call.1} parent=31 // pred_region
          %s206 = smul.u32 2, %s16
          %p207 = scmp.lt.s32.totalorder %s206, 3
          %s208 = scalar_select %p207, %s206, 3
          %s209 = smul.addr %s208, 8
          %s210 = scalar_lea.vmem %s0, %s209
          %s211 = smul.u32 2, %s16
        $region36: #{tpu_custom_call.1} parent=31 // pred_fallthru
          _
      $region32: #{tpu_custom_call.1} parent=5 // pred_fallthru
        _
      %p212 = scmp.le.s32.totalorder 1, %s16
      %p213 = scmp.lt.s32.totalorder %s16, 3
      %p214 = pnand %p212, %p213
      %p215 = pneg %p214
      // Predicated region
      $region37: #{tpu_custom_call.1} parent=5 // pred_check
        _
      $region38: #{tpu_custom_call.1} parent=5 // pred_check_branch
        %217 = sbr.rel (%p214) target = $region40
      $region39: #{tpu_custom_call.1} parent=5 // pred_region
        %s218 = ssub.s32 %s16, 1
        // Predicated region
        $region41: #{tpu_custom_call.1} parent=39 // pred_check
          %p219 = pneg %p63
        $region42: #{tpu_custom_call.1} parent=39 // pred_check_branch
          %221 = sbr.rel (%p219) target = $region44
        $region43: #{tpu_custom_call.1} parent=39 // pred_region
          %222 = dma.done [#allocation4], 10240
        $region44: #{tpu_custom_call.1} parent=39 // pred_fallthru
          _
        // Predicated region
        $region45: #{tpu_custom_call.1} parent=39 // pred_check
          %p223 = pneg %p105
        $region46: #{tpu_custom_call.1} parent=39 // pred_check_branch
          %225 = sbr.rel (%p223) target = $region48
        $region47: #{tpu_custom_call.1} parent=39 // pred_region
          %226 = dma.done [#allocation7], 2048
        $region48: #{tpu_custom_call.1} parent=39 // pred_fallthru
          _
        %s227 = smul.u32 2, %s21
        %p228 = scmp.lt.s32.totalorder %s227, 3
        %s229 = scalar_select %p228, %s227, 3
        %s230 = smul.addr %s229, 8
        %s231 = scalar_lea.vmem %s0, %s230
        %p232 = pneg %p42
        %p233 = pneg %p39
        %p234 = pneg %p63
        %p235 = pneg %p60
        %p236 = pneg %p84
        %p237 = pneg %p81
        %p238 = pneg %p105
        %p239 = pneg %p102
        %p240 = pneg %p126
        %p241 = pneg %p123
        %p242 = pneg %p152
        %p243 = pneg %p149
        %s244 = sand.u32 %s139, 1
        %s245 = scalar_lea.sflag [#allocation5], %s244
        %s246 = sand.u32 %s139, 1
        %s247 = smul.addr %s246, 16
        %s248 = scalar_lea.vmem [#allocation8], %s247
        %s249 = smul.u32 2, %s21
        %p250 = scmp.lt.s32.totalorder %s249, 3
        %s251 = scalar_select %p250, %s249, 3
        %s252 = smul.addr %s251, 8
        %s253 = scalar_lea.vmem %s0, %s252
        %s254 = smul.u32 2, %s21
        %s255 = smul.u32 2, %s21
        %v256 = vld [vmem:[%s253] sm:$0xff]
        %v257 = vld [vmem:[%s253 + $0x8] sm:$0xff]
        %v258 = vlaneseq
        %v259 = vand.u32 %v258, 127
        %260 = vset.pattern.permute.xlu0 0
        %261 = vperm.xlu0 %260, %v256
        %v262 = vpop.permute.xlu0 %261
        %263 = vset.pattern.permute.xlu0 0
        %264 = vperm.xlu0 %263, %v257
        %v265 = vpop.permute.xlu0 %264
        %vm266 = vcmp.eq.s32.totalorder %v262, %v259
        %vm267 = vcmp.eq.s32.totalorder %v265, %v259
        %v268 = vsel %vm266, 1, 0
        %v269 = vsel %vm267, 1, 0
        %v270 = vcvt.s32.f32 %v268
        %v271 = vcvt.s32.f32 %v269
        %272 = vst [vmem:[#allocation2] sm:$0xff] %v270
        %273 = vst [vmem:[#allocation2 + $0x28] sm:$0xff] %v271
        %274 = vset.pattern.permute.xlu0 1
        %275 = vperm.xlu0 %274, %v256
        %v276 = vpop.permute.xlu0 %275
        %277 = vset.pattern.permute.xlu0 1
        %278 = vperm.xlu0 %277, %v257
        %v279 = vpop.permute.xlu0 %278
        %vm280 = vcmp.eq.s32.totalorder %v276, %v259
        %vm281 = vcmp.eq.s32.totalorder %v279, %v259
        %v282 = vsel %vm280, 1, 0
        %v283 = vsel %vm281, 1, 0
        %v284 = vcvt.s32.f32 %v282
        %v285 = vcvt.s32.f32 %v283
        %286 = vst [vmem:[#allocation2 + $0x8] sm:$0xff] %v284
        %287 = vst [vmem:[#allocation2 + $0x30] sm:$0xff] %v285
        %288 = vset.pattern.permute.xlu0 2
        %289 = vperm.xlu0 %288, %v256
        %v290 = vpop.permute.xlu0 %289
        %291 = vset.pattern.permute.xlu0 2
        %292 = vperm.xlu0 %291, %v257
        %v293 = vpop.permute.xlu0 %292
        %vm294 = vcmp.eq.s32.totalorder %v290, %v259
        %vm295 = vcmp.eq.s32.totalorder %v293, %v259
        %v296 = vsel %vm294, 1, 0
        %v297 = vsel %vm295, 1, 0
        %v298 = vcvt.s32.f32 %v296
        %v299 = vcvt.s32.f32 %v297
        %300 = vst [vmem:[#allocation2 + $0x10] sm:$0xff] %v298
        %301 = vst [vmem:[#allocation2 + $0x38] sm:$0xff] %v299
        %302 = vset.pattern.permute.xlu0 3
        %303 = vperm.xlu0 %302, %v256
        %v304 = vpop.permute.xlu0 %303
        %305 = vset.pattern.permute.xlu0 3
        %306 = vperm.xlu0 %305, %v257
        %v307 = vpop.permute.xlu0 %306
        %vm308 = vcmp.eq.s32.totalorder %v304, %v259
        %vm309 = vcmp.eq.s32.totalorder %v307, %v259
        %v310 = vsel %vm308, 1, 0
        %v311 = vsel %vm309, 1, 0
        %v312 = vcvt.s32.f32 %v310
        %v313 = vcvt.s32.f32 %v311
        %314 = vst [vmem:[#allocation2 + $0x18] sm:$0xff] %v312
        %315 = vst [vmem:[#allocation2 + $0x40] sm:$0xff] %v313
        %316 = vset.pattern.permute.xlu0 4
        %317 = vperm.xlu0 %316, %v256
        %v318 = vpop.permute.xlu0 %317
        %319 = vset.pattern.permute.xlu0 4
        %320 = vperm.xlu0 %319, %v257
        %v321 = vpop.permute.xlu0 %320
        %vm322 = vcmp.eq.s32.totalorder %v318, %v259
        %vm323 = vcmp.eq.s32.totalorder %v321, %v259
        %v324 = vsel %vm322, 1, 0
        %v325 = vsel %vm323, 1, 0
        %v326 = vcvt.s32.f32 %v324
        %v327 = vcvt.s32.f32 %v325
        %328 = vst [vmem:[#allocation2 + $0x20] sm:$0xff] %v326
        %329 = vst [vmem:[#allocation2 + $0x48] sm:$0xff] %v327
        %v330 = vld [vmem:[#allocation2] sm:$0xff]
        %v331 = vld [vmem:[#allocation2 + $0x8] sm:$0xff]
        %v332 = vld [vmem:[#allocation2 + $0x10] sm:$0xff]
        %v333 = vld [vmem:[#allocation2 + $0x18] sm:$0xff]
        %v334 = vld [vmem:[#allocation2 + $0x20] sm:$0xff]
        %v335 = vld [vmem:[#allocation2 + $0x28] sm:$0xff]
        %v336 = vld [vmem:[#allocation2 + $0x30] sm:$0xff]
        %v337 = vld [vmem:[#allocation2 + $0x38] sm:$0xff]
        %v338 = vld [vmem:[#allocation2 + $0x40] sm:$0xff]
        %v339 = vld [vmem:[#allocation2 + $0x48] sm:$0xff]
        %v340 = vld [vmem:[#allocation3] sm:$0xff]
        %v341 = vld [vmem:[#allocation3 + $0x8] sm:$0xff]
        %v342 = vld [vmem:[#allocation3 + $0x10] sm:$0xff]
        %v343 = vld [vmem:[#allocation3 + $0x18] sm:$0xff]
        %v344 = vld [vmem:[#allocation3 + $0x20] sm:$0xff]
        %v345 = vld [vmem:[#allocation3 + $0x28] sm:$0xff]
        %v346 = vld [vmem:[#allocation3 + $0x30] sm:$0xff]
        %v347 = vld [vmem:[#allocation3 + $0x38] sm:$0xff]
        %v348 = vld [vmem:[#allocation3 + $0x40] sm:$0xff]
        %v349 = vld [vmem:[#allocation3 + $0x48] sm:$0xff]
        %v350 = vld [vmem:[#allocation3 + $0x50] sm:$0xff]
        %v351 = vld [vmem:[#allocation3 + $0x58] sm:$0xff]
        %v352 = vld [vmem:[#allocation3 + $0x60] sm:$0xff]
        %v353 = vld [vmem:[#allocation3 + $0x68] sm:$0xff]
        %v354 = vld [vmem:[#allocation3 + $0x70] sm:$0xff]
        %v355 = vld [vmem:[#allocation3 + $0x78] sm:$0xff]
        %v356 = vld [vmem:[#allocation3 + $0x80] sm:$0xff]
        %v357 = vld [vmem:[#allocation3 + $0x88] sm:$0xff]
        %v358 = vld [vmem:[#allocation3 + $0x90] sm:$0xff]
        %v359 = vld [vmem:[#allocation3 + $0x98] sm:$0xff]
        %v360 = vld [vmem:[#allocation3 + $0xa0] sm:$0xff]
        %v361 = vld [vmem:[#allocation3 + $0xa8] sm:$0xff]
        %v362 = vld [vmem:[#allocation3 + $0xb0] sm:$0xff]
        %v363 = vld [vmem:[#allocation3 + $0xb8] sm:$0xff]
        %v364 = vld [vmem:[#allocation3 + $0xc0] sm:$0xff]
        %v365 = vld [vmem:[#allocation3 + $0xc8] sm:$0xff]
        %v366 = vld [vmem:[#allocation3 + $0xd0] sm:$0xff]
        %v367 = vld [vmem:[#allocation3 + $0xd8] sm:$0xff]
        %v368 = vld [vmem:[#allocation3 + $0xe0] sm:$0xff]
        %v369 = vld [vmem:[#allocation3 + $0xe8] sm:$0xff]
        %v370 = vld [vmem:[#allocation3 + $0xf0] sm:$0xff]
        %v371 = vld [vmem:[#allocation3 + $0xf8] sm:$0xff]
        %v372 = vld [vmem:[#allocation3 + $0x100] sm:$0xff]
        %v373 = vld [vmem:[#allocation3 + $0x108] sm:$0xff]
        %v374 = vld [vmem:[#allocation3 + $0x110] sm:$0xff]
        %v375 = vld [vmem:[#allocation3 + $0x118] sm:$0xff]
        %v376 = vld [vmem:[#allocation3 + $0x120] sm:$0xff]
        %v377 = vld [vmem:[#allocation3 + $0x128] sm:$0xff]
        %v378 = vld [vmem:[#allocation3 + $0x130] sm:$0xff]
        %v379 = vld [vmem:[#allocation3 + $0x138] sm:$0xff]
        %v380 = vld [vmem:[#allocation3 + $0x140] sm:$0xff]
        %v381 = vld [vmem:[#allocation3 + $0x148] sm:$0xff]
        %v382 = vld [vmem:[#allocation3 + $0x150] sm:$0xff]
        %v383 = vld [vmem:[#allocation3 + $0x158] sm:$0xff]
        %v384 = vld [vmem:[#allocation3 + $0x160] sm:$0xff]
        %v385 = vld [vmem:[#allocation3 + $0x168] sm:$0xff]
        %v386 = vld [vmem:[#allocation3 + $0x170] sm:$0xff]
        %v387 = vld [vmem:[#allocation3 + $0x178] sm:$0xff]
        %v388 = vld [vmem:[#allocation3 + $0x180] sm:$0xff]
        %v389 = vld [vmem:[#allocation3 + $0x188] sm:$0xff]
        %v390 = vld [vmem:[#allocation3 + $0x190] sm:$0xff]
        %v391 = vld [vmem:[#allocation3 + $0x198] sm:$0xff]
        %v392 = vld [vmem:[#allocation3 + $0x1a0] sm:$0xff]
        %v393 = vld [vmem:[#allocation3 + $0x1a8] sm:$0xff]
        %v394 = vld [vmem:[#allocation3 + $0x1b0] sm:$0xff]
        %v395 = vld [vmem:[#allocation3 + $0x1b8] sm:$0xff]
        %v396 = vld [vmem:[#allocation3 + $0x1c0] sm:$0xff]
        %v397 = vld [vmem:[#allocation3 + $0x1c8] sm:$0xff]
        %v398 = vld [vmem:[#allocation3 + $0x1d0] sm:$0xff]
        %v399 = vld [vmem:[#allocation3 + $0x1d8] sm:$0xff]
        %v400 = vld [vmem:[#allocation3 + $0x1e0] sm:$0xff]
        %v401 = vld [vmem:[#allocation3 + $0x1e8] sm:$0xff]
        %v402 = vld [vmem:[#allocation3 + $0x1f0] sm:$0xff]
        %v403 = vld [vmem:[#allocation3 + $0x1f8] sm:$0xff]
        %v404 = vld [vmem:[#allocation3 + $0x200] sm:$0xff]
        %v405 = vld [vmem:[#allocation3 + $0x208] sm:$0xff]
        %v406 = vld [vmem:[#allocation3 + $0x210] sm:$0xff]
        %v407 = vld [vmem:[#allocation3 + $0x218] sm:$0xff]
        %v408 = vld [vmem:[#allocation3 + $0x220] sm:$0xff]
        %v409 = vld [vmem:[#allocation3 + $0x228] sm:$0xff]
        %v410 = vld [vmem:[#allocation3 + $0x230] sm:$0xff]
        %v411 = vld [vmem:[#allocation3 + $0x238] sm:$0xff]
        %v412 = vld [vmem:[#allocation3 + $0x240] sm:$0xff]
        %v413 = vld [vmem:[#allocation3 + $0x248] sm:$0xff]
        %v414 = vld [vmem:[#allocation3 + $0x250] sm:$0xff]
        %v415 = vld [vmem:[#allocation3 + $0x258] sm:$0xff]
        %v416 = vld [vmem:[#allocation3 + $0x260] sm:$0xff]
        %v417 = vld [vmem:[#allocation3 + $0x268] sm:$0xff]
        %v418 = vld [vmem:[#allocation3 + $0x270] sm:$0xff]
        %v419 = vld [vmem:[#allocation3 + $0x278] sm:$0xff]
        %v420 = vld [vmem:[%s2] sm:$0x1]
        %v422 = vlaneseq
        %v423 = vshrl.u32 %v422, 7
        %v424 = vsub.s32 0, %v423
        %v425 = vrot.slane %v420, %v424
        %427 = vmatprep.subr.mxu0 0.0
        %428 = vmatpush1.msra.mxu0 %v340
        %429 = vmatprep.subr.mxu0 0.0
        %430 = vmatpush1.msra.mxu0 %v341
        %431 = vmatprep.subr.mxu0 0.0
        %432 = vmatpush1.msra.mxu0 %v342
        %433 = vmatprep.subr.mxu0 0.0
        %434 = vmatpush1.msra.mxu0 %v343
        %435 = vmatprep.subr.mxu0 0.0
        %436 = vmatpush1.msra.mxu0 %v344
        %437 = vmatprep.subr.mxu0 0.0
        %438 = vmatpush1.msra.mxu0 %v345
        %439 = vmatprep.subr.mxu0 0.0
        %440 = vmatpush1.msra.mxu0 %v346
        %441 = vmatprep.subr.mxu0 0.0
        %442 = vmatpush1.msra.mxu0 %v347
        %443 = vmatprep.subr.mxu0 0.0
        %444 = vmatpush1.msra.mxu0 %v348
        %445 = vmatprep.subr.mxu0 0.0
        %446 = vmatpush1.msra.mxu0 %v349
        %447 = vmatprep.subr.mxu0 0.0
        %448 = vmatpush1.msra.mxu0 %v350
        %449 = vmatprep.subr.mxu0 0.0
        %450 = vmatpush1.msra.mxu0 %v351
        %451 = vmatprep.subr.mxu0 0.0
        %452 = vmatpush1.msra.mxu0 %v352
        %453 = vmatprep.subr.mxu0 0.0
        %454 = vmatpush1.msra.mxu0 %v353
        %455 = vmatprep.subr.mxu0 0.0
        %456 = vmatpush1.msra.mxu0 %v354
        %457 = vmatprep.subr.mxu0 0.0
        %458 = vmatpush1.msra.mxu0 %v355
        %459 = vmatprep.subr.mxu0 0.0
        %460 = vmatpush1.msra.mxu0 %v356
        %461 = vmatprep.subr.mxu0 0.0
        %462 = vmatpush1.msra.mxu0 %v357
        %463 = vmatprep.subr.mxu0 0.0
        %464 = vmatpush1.msra.mxu0 %v358
        %465 = vmatprep.subr.mxu0 0.0
        %466 = vmatpush1.msra.mxu0 %v359
        %467 = vmatprep.subr.mxu0 0.0
        %468 = vmatpush1.msra.mxu0 %v360
        %469 = vmatprep.subr.mxu0 0.0
        %470 = vmatpush1.msra.mxu0 %v361
        %471 = vmatprep.subr.mxu0 0.0
        %472 = vmatpush1.msra.mxu0 %v362
        %473 = vmatprep.subr.mxu0 0.0
        %474 = vmatpush1.msra.mxu0 %v363
        %475 = vmatprep.subr.mxu0 0.0
        %476 = vmatpush1.msra.mxu0 %v364
        %477 = vmatprep.subr.mxu0 0.0
        %478 = vmatpush1.msra.mxu0 %v365
        %479 = vmatprep.subr.mxu0 0.0
        %480 = vmatpush1.msra.mxu0 %v366
        %481 = vmatprep.subr.mxu0 0.0
        %482 = vmatpush1.msra.mxu0 %v367
        %483 = vmatprep.subr.mxu0 0.0
        %484 = vmatpush1.msra.mxu0 %v368
        %485 = vmatprep.subr.mxu0 0.0
        %486 = vmatpush1.msra.mxu0 %v369
        %487 = vmatprep.subr.mxu0 0.0
        %488 = vmatpush1.msra.mxu0 %v370
        %489 = vmatprep.subr.mxu0 0.0
        %490 = vmatpush1.msra.mxu0 %v371
        %491 = vmatprep.mubr.f32.mxu0 %v331
        %492 = vmatmul.mubr.f32.gmra.mrb[0].mxu0 %v330
        %v493 = vpop.f32.mrb[0].mxu0
        %v494 = vadd.f32 %v425, %v493
        %v495 = vpop.f32.mrb[0].mxu0
        %496 = vmatprep.mubr.f32.mxu0 %v336
        %497 = vmatmul.mubr.f32.gmra.mrb[0].mxu0 %v335
        %v498 = vpop.f32.mrb[0].mxu0
        %v499 = vadd.f32 %v425, %v498
        %v500 = vpop.f32.mrb[0].mxu0
        %501 = vdwg.mxu0
        %502 = vmatprep.subr.mxu0 0.0
        %503 = vmatpush1.msra.mxu0 %v372
        %504 = vmatprep.subr.mxu0 0.0
        %505 = vmatpush1.msra.mxu0 %v373
        %506 = vmatprep.subr.mxu0 0.0
        %507 = vmatpush1.msra.mxu0 %v374
        %508 = vmatprep.subr.mxu0 0.0
        %509 = vmatpush1.msra.mxu0 %v375
        %510 = vmatprep.subr.mxu0 0.0
        %511 = vmatpush1.msra.mxu0 %v376
        %512 = vmatprep.subr.mxu0 0.0
        %513 = vmatpush1.msra.mxu0 %v377
        %514 = vmatprep.subr.mxu0 0.0
        %515 = vmatpush1.msra.mxu0 %v378
        %516 = vmatprep.subr.mxu0 0.0
        %517 = vmatpush1.msra.mxu0 %v379
        %518 = vmatprep.subr.mxu0 0.0
        %519 = vmatpush1.msra.mxu0 %v380
        %520 = vmatprep.subr.mxu0 0.0
        %521 = vmatpush1.msra.mxu0 %v381
        %522 = vmatprep.subr.mxu0 0.0
        %523 = vmatpush1.msra.mxu0 %v382
        %524 = vmatprep.subr.mxu0 0.0
        %525 = vmatpush1.msra.mxu0 %v383
        %526 = vmatprep.subr.mxu0 0.0
        %527 = vmatpush1.msra.mxu0 %v384
        %528 = vmatprep.subr.mxu0 0.0
        %529 = vmatpush1.msra.mxu0 %v385
        %530 = vmatprep.subr.mxu0 0.0
        %531 = vmatpush1.msra.mxu0 %v386
        %532 = vmatprep.subr.mxu0 0.0
        %533 = vmatpush1.msra.mxu0 %v387
        %534 = vmatprep.subr.mxu0 0.0
        %535 = vmatpush1.msra.mxu0 %v388
        %536 = vmatprep.subr.mxu0 0.0
        %537 = vmatpush1.msra.mxu0 %v389
        %538 = vmatprep.subr.mxu0 0.0
        %539 = vmatpush1.msra.mxu0 %v390
        %540 = vmatprep.subr.mxu0 0.0
        %541 = vmatpush1.msra.mxu0 %v391
        %542 = vmatprep.subr.mxu0 0.0
        %543 = vmatpush1.msra.mxu0 %v392
        %544 = vmatprep.subr.mxu0 0.0
        %545 = vmatpush1.msra.mxu0 %v393
        %546 = vmatprep.subr.mxu0 0.0
        %547 = vmatpush1.msra.mxu0 %v394
        %548 = vmatprep.subr.mxu0 0.0
        %549 = vmatpush1.msra.mxu0 %v395
        %550 = vmatprep.subr.mxu0 0.0
        %551 = vmatpush1.msra.mxu0 %v396
        %552 = vmatprep.subr.mxu0 0.0
        %553 = vmatpush1.msra.mxu0 %v397
        %554 = vmatprep.subr.mxu0 0.0
        %555 = vmatpush1.msra.mxu0 %v398
        %556 = vmatprep.subr.mxu0 0.0
        %557 = vmatpush1.msra.mxu0 %v399
        %558 = vmatprep.subr.mxu0 0.0
        %559 = vmatpush1.msra.mxu0 %v400
        %560 = vmatprep.subr.mxu0 0.0
        %561 = vmatpush1.msra.mxu0 %v401
        %562 = vmatprep.subr.mxu0 0.0
        %563 = vmatpush1.msra.mxu0 %v402
        %564 = vmatprep.subr.mxu0 0.0
        %565 = vmatpush1.msra.mxu0 %v403
        %566 = vmatprep.mubr.f32.mxu0 %v333
        %567 = vmatmul.mubr.f32.gmra.mrb[0].mxu0 %v332
        %v568 = vpop.f32.mrb[0].mxu0
        %v569 = vadd.f32 %v494, %v568
        %v570 = vpop.f32.mrb[0].mxu0
        %571 = vmatprep.mubr.f32.mxu0 %v338
        %572 = vmatmul.mubr.f32.gmra.mrb[0].mxu0 %v337
        %v573 = vpop.f32.mrb[0].mxu0
        %v574 = vadd.f32 %v499, %v573
        %v575 = vpop.f32.mrb[0].mxu0
        %576 = vdwg.mxu0
        %577 = vmatprep.subr.mxu0 0.0
        %578 = vmatpush1.msra.mxu0 %v404
        %579 = vmatprep.subr.mxu0 0.0
        %580 = vmatpush1.msra.mxu0 %v405
        %581 = vmatprep.subr.mxu0 0.0
        %582 = vmatpush1.msra.mxu0 %v406
        %583 = vmatprep.subr.mxu0 0.0
        %584 = vmatpush1.msra.mxu0 %v407
        %585 = vmatprep.subr.mxu0 0.0
        %586 = vmatpush1.msra.mxu0 %v408
        %587 = vmatprep.subr.mxu0 0.0
        %588 = vmatpush1.msra.mxu0 %v409
        %589 = vmatprep.subr.mxu0 0.0
        %590 = vmatpush1.msra.mxu0 %v410
        %591 = vmatprep.subr.mxu0 0.0
        %592 = vmatpush1.msra.mxu0 %v411
        %593 = vmatprep.subr.mxu0 0.0
        %594 = vmatpush1.msra.mxu0 %v412
        %595 = vmatprep.subr.mxu0 0.0
        %596 = vmatpush1.msra.mxu0 %v413
        %597 = vmatprep.subr.mxu0 0.0
        %598 = vmatpush1.msra.mxu0 %v414
        %599 = vmatprep.subr.mxu0 0.0
        %600 = vmatpush1.msra.mxu0 %v415
        %601 = vmatprep.subr.mxu0 0.0
        %602 = vmatpush1.msra.mxu0 %v416
        %603 = vmatprep.subr.mxu0 0.0
        %604 = vmatpush1.msra.mxu0 %v417
        %605 = vmatprep.subr.mxu0 0.0
        %606 = vmatpush1.msra.mxu0 %v418
        %607 = vmatprep.subr.mxu0 0.0
        %608 = vmatpush1.msra.mxu0 %v419
        %609 = vmatprep.subr.mxu0 0.0
        %610 = vmatpush1.msra.mxu0 0.0
        %611 = vmatprep.subr.mxu0 0.0
        %612 = vmatpush1.msra.mxu0 0.0
        %613 = vmatprep.subr.mxu0 0.0
        %614 = vmatpush1.msra.mxu0 0.0
        %615 = vmatprep.subr.mxu0 0.0
        %616 = vmatpush1.msra.mxu0 0.0
        %617 = vmatprep.subr.mxu0 0.0
        %618 = vmatpush1.msra.mxu0 0.0
        %619 = vmatprep.subr.mxu0 0.0
        %620 = vmatpush1.msra.mxu0 0.0
        %621 = vmatprep.subr.mxu0 0.0
        %622 = vmatpush1.msra.mxu0 0.0
        %623 = vmatprep.subr.mxu0 0.0
        %624 = vmatpush1.msra.mxu0 0.0
        %625 = vmatprep.subr.mxu0 0.0
        %626 = vmatpush1.msra.mxu0 0.0
        %627 = vmatprep.subr.mxu0 0.0
        %628 = vmatpush1.msra.mxu0 0.0
        %629 = vmatprep.subr.mxu0 0.0
        %630 = vmatpush1.msra.mxu0 0.0
        %631 = vmatprep.subr.mxu0 0.0
        %632 = vmatpush1.msra.mxu0 0.0
        %633 = vmatprep.subr.mxu0 0.0
        %634 = vmatpush1.msra.mxu0 0.0
        %635 = vmatprep.subr.mxu0 0.0
        %636 = vmatpush1.msra.mxu0 0.0
        %637 = vmatprep.subr.mxu0 0.0
        %638 = vmatpush1.msra.mxu0 0.0
        %639 = vmatprep.subr.mxu0 0.0
        %640 = vmatpush1.msra.mxu0 0.0
        %641 = vmatprep.mubr.f32.mxu0 0.0
        %642 = vmatmul.mubr.f32.gmra.mrb[0].mxu0 %v334
        %v643 = vpop.f32.mrb[0].mxu0
        %v644 = vadd.f32 %v569, %v643
        %v645 = vpop.f32.mrb[0].mxu0
        %646 = vmatprep.mubr.f32.mxu0 0.0
        %647 = vmatmul.mubr.f32.gmra.mrb[0].mxu0 %v339
        %v648 = vpop.f32.mrb[0].mxu0
        %v649 = vadd.f32 %v574, %v648
        %v650 = vpop.f32.mrb[0].mxu0
        %651 = vdwg.mxu0
        %v652 = vtanh.pop %v644
        %v653 = vtanh.pop %v649
        %v654 = vld [vmem:[#allocation6] sm:$0xff]
        %v655 = vld [vmem:[#allocation6 + $0x8] sm:$0xff]
        %v656 = vld [vmem:[#allocation6 + $0x10] sm:$0xff]
        %v657 = vld [vmem:[#allocation6 + $0x18] sm:$0xff]
        %v658 = vld [vmem:[#allocation6 + $0x20] sm:$0xff]
        %v659 = vld [vmem:[#allocation6 + $0x28] sm:$0xff]
        %v660 = vld [vmem:[#allocation6 + $0x30] sm:$0xff]
        %v661 = vld [vmem:[#allocation6 + $0x38] sm:$0xff]
        %v662 = vld [vmem:[#allocation6 + $0x40] sm:$0xff]
        %v663 = vld [vmem:[#allocation6 + $0x48] sm:$0xff]
        %v664 = vld [vmem:[#allocation6 + $0x50] sm:$0xff]
        %v665 = vld [vmem:[#allocation6 + $0x58] sm:$0xff]
        %v666 = vld [vmem:[#allocation6 + $0x60] sm:$0xff]
        %v667 = vld [vmem:[#allocation6 + $0x68] sm:$0xff]
        %v668 = vld [vmem:[#allocation6 + $0x70] sm:$0xff]
        %v669 = vld [vmem:[#allocation6 + $0x78] sm:$0xff]
        %v670 = vld [vmem:[%s4] sm:$0x1]
        %v672 = vlaneseq
        %v673 = vshrl.u32 %v672, 7
        %v674 = vsub.s32 0, %v673
        %v675 = vrot.slane %v670, %v674
        %677 = vmatprep.subr.mxu0 0.0
        %678 = vmatpush1.msra.mxu0 %v654
        %679 = vmatprep.subr.mxu0 0.0
        %680 = vmatpush1.msra.mxu0 %v655
        %681 = vmatprep.subr.mxu0 0.0
        %682 = vmatpush1.msra.mxu0 %v656
        %683 = vmatprep.subr.mxu0 0.0
        %684 = vmatpush1.msra.mxu0 %v657
        %685 = vmatprep.subr.mxu0 0.0
        %686 = vmatpush1.msra.mxu0 %v658
        %687 = vmatprep.subr.mxu0 0.0
        %688 = vmatpush1.msra.mxu0 %v659
        %689 = vmatprep.subr.mxu0 0.0
        %690 = vmatpush1.msra.mxu0 %v660
        %691 = vmatprep.subr.mxu0 0.0
        %692 = vmatpush1.msra.mxu0 %v661
        %693 = vmatprep.subr.mxu0 0.0
        %694 = vmatpush1.msra.mxu0 %v662
        %695 = vmatprep.subr.mxu0 0.0
        %696 = vmatpush1.msra.mxu0 %v663
        %697 = vmatprep.subr.mxu0 0.0
        %698 = vmatpush1.msra.mxu0 %v664
        %699 = vmatprep.subr.mxu0 0.0
        %700 = vmatpush1.msra.mxu0 %v665
        %701 = vmatprep.subr.mxu0 0.0
        %702 = vmatpush1.msra.mxu0 %v666
        %703 = vmatprep.subr.mxu0 0.0
        %704 = vmatpush1.msra.mxu0 %v667
        %705 = vmatprep.subr.mxu0 0.0
        %706 = vmatpush1.msra.mxu0 %v668
        %707 = vmatprep.subr.mxu0 0.0
        %708 = vmatpush1.msra.mxu0 %v669
        %709 = vmatprep.subr.mxu0 0.0
        %710 = vmatpush1.msra.mxu0 0.0
        %711 = vmatprep.subr.mxu0 0.0
        %712 = vmatpush1.msra.mxu0 0.0
        %713 = vmatprep.subr.mxu0 0.0
        %714 = vmatpush1.msra.mxu0 0.0
        %715 = vmatprep.subr.mxu0 0.0
        %716 = vmatpush1.msra.mxu0 0.0
        %717 = vmatprep.subr.mxu0 0.0
        %718 = vmatpush1.msra.mxu0 0.0
        %719 = vmatprep.subr.mxu0 0.0
        %720 = vmatpush1.msra.mxu0 0.0
        %721 = vmatprep.subr.mxu0 0.0
        %722 = vmatpush1.msra.mxu0 0.0
        %723 = vmatprep.subr.mxu0 0.0
        %724 = vmatpush1.msra.mxu0 0.0
        %725 = vmatprep.subr.mxu0 0.0
        %726 = vmatpush1.msra.mxu0 0.0
        %727 = vmatprep.subr.mxu0 0.0
        %728 = vmatpush1.msra.mxu0 0.0
        %729 = vmatprep.subr.mxu0 0.0
        %730 = vmatpush1.msra.mxu0 0.0
        %731 = vmatprep.subr.mxu0 0.0
        %732 = vmatpush1.msra.mxu0 0.0
        %733 = vmatprep.subr.mxu0 0.0
        %734 = vmatpush1.msra.mxu0 0.0
        %735 = vmatprep.subr.mxu0 0.0
        %736 = vmatpush1.msra.mxu0 0.0
        %737 = vmatprep.subr.mxu0 0.0
        %738 = vmatpush1.msra.mxu0 0.0
        %739 = vmatprep.subr.mxu0 0.0
        %740 = vmatpush1.msra.mxu0 0.0
        %741 = vmatprep.mubr.f32.mxu0 0.0
        %742 = vmatmul.mubr.f32.gmra.mrb[0].mxu0 %v652
        %v743 = vpop.f32.mrb[0].mxu0
        %v744 = vadd.f32 %v675, %v743
        %v745 = vpop.f32.mrb[0].mxu0
        %746 = vmatprep.mubr.f32.mxu0 0.0
        %747 = vmatmul.mubr.f32.gmra.mrb[0].mxu0 %v653
        %v748 = vpop.f32.mrb[0].mxu0
        %v749 = vadd.f32 %v675, %v748
        %v750 = vpop.f32.mrb[0].mxu0
        %751 = vdwg.mxu0
        %754 = vrot.lane.b32.xlu0 %v744, 1
        %v755 = vpop.permute.xlu0 %754
        %756 = vrot.lane.b32.xlu0 %v749, 1
        %v757 = vpop.permute.xlu0 %756
        %v760 = vsub.f32 %v744, %v755
        %v761 = vsub.f32 %v749, %v757
        %v762 = vmax.f32 %v760, 0.0
        %v763 = vmax.f32 %v761, 0.0
        %v764 = vand.u32 2147483647, %v760
        %v765 = vand.u32 2147483647, %v761
        %v766 = vsub.f32 0.0, %v764
        %v767 = vsub.f32 0.0, %v765
        %v768 = vmul.f32 %v766, 1.442695
        %v769 = vpow.pop %v768
        %v770 = vmul.f32 %v767, 1.442695
        %v771 = vpow.pop %v770
        %v772 = vadd.f32 %v769, 1.0
        %v773 = vadd.f32 %v771, 1.0
        %v774 = vlog2.pop %v772
        %v775 = vmul.f32 %v774, 0.6931472
        %v776 = vlog2.pop %v773
        %v777 = vmul.f32 %v776, 0.6931472
        %v778 = vadd.f32 %v762, %v775
        %v779 = vadd.f32 %v763, %v777
        %vm780 = vcmp.eq.s32.totalorder %v259, 0
        %v781 = vsub.f32 0.0, %v778
        %v782 = vsub.f32 0.0, %v779
        %v783 = vsub.f32 %v760, %v778
        %v784 = vsub.f32 %v761, %v779
        %786 = vset.pattern.permute.xlu0 1
        %787 = vperm.xlu0 %786, %v781
        %v788 = vpop.permute.xlu0 %787
        %791 = vset.pattern.permute.xlu0 1
        %792 = vperm.xlu0 %791, %v782
        %v793 = vpop.permute.xlu0 %792
        %796 = vset.pattern.permute.xlu0 1
        %797 = vperm.xlu0 %796, %v783
        %v798 = vpop.permute.xlu0 %797
        %801 = vset.pattern.permute.xlu0 1
        %802 = vperm.xlu0 %801, %v784
        %v803 = vpop.permute.xlu0 %802
        %v805 = vsel %vm780, %v788, %v798
        %v806 = vsel %vm780, %v793, %v803
        %807 = vst [vmem:[%s248] sm:$0xff] %v805
        %808 = vst [vmem:[%s248 + $0x8] sm:$0xff] %v806
        %s809 = sand.u32 %s139, 1
        %s810 = scalar_lea.sflag [#allocation5], %s809
        %s811 = sand.u32 %s139, 1
        %s812 = smul.addr %s811, 16
        %s813 = scalar_lea.vmem [#allocation8], %s812
        // Predicated region
        $region49: #{tpu_custom_call.1} parent=39 // pred_check
          %p814 = pneg %p149
        $region50: #{tpu_custom_call.1} parent=39 // pred_check_branch
          %816 = sbr.rel (%p814) target = $region52
        $region51: #{tpu_custom_call.1} parent=39 // pred_region
          %s817 = smul.u32 2, %s21
          %s819 = ssub.s32 256, 256
          %820 = vsyncadd %s810, %s819
          %s821 = smul.addr %s817, 128
          %s822 = scalar_lea.hbm %s5, %s821
          %s823 = sshll.u32 %s813, 4
          %s824 = int_to_ptr.vmem [resolvable:$true] %s823
          %829 = dma.vmem_to_hbm [thread:$0]  %s824, 256, %s822, %s810, 128, 128, 8
        $region52: #{tpu_custom_call.1} parent=39 // pred_fallthru
          _
      $region40: #{tpu_custom_call.1} parent=5 // pred_fallthru
        _
      %p830 = scmp.le.s32.totalorder 2, %s16
      // Predicated region
      $region53: #{tpu_custom_call.1} parent=5 // pred_check
        %p831 = pneg %p830
      $region54: #{tpu_custom_call.1} parent=5 // pred_check_branch
        %833 = sbr.rel (%p831) target = $region56
      $region55: #{tpu_custom_call.1} parent=5 // pred_region
        %s834 = ssub.s32 %s16, 2
        // Predicated region
        $region57: #{tpu_custom_call.1} parent=55 // pred_check
          %p835 = pneg %p155
        $region58: #{tpu_custom_call.1} parent=55 // pred_check_branch
          %837 = sbr.rel (%p835) target = $region60
        $region59: #{tpu_custom_call.1} parent=55 // pred_region
          %s838 = sand.u32 %s140, 1
          %s839 = scalar_lea.sflag [#allocation5], %s838
          %s840 = sand.u32 %s140, 1
          %s841 = smul.addr %s840, 16
          %s842 = scalar_lea.vmem [#allocation8], %s841
          %843 = dma.done %s839, 256
        $region60: #{tpu_custom_call.1} parent=55 // pred_fallthru
          _
      $region56: #{tpu_custom_call.1} parent=5 // pred_fallthru
        _
    $region6: #{tpu_custom_call.1} parent=1 // loop_footer
      %s20 = sadd.s32 1, %s16
    $region7: #{tpu_custom_call.1} parent=1 // loop_footer_branch
      %15 = sbr.rel target = $region3
    $region8: #{tpu_custom_call.1} parent=1 // loop_exit
      _
    %844 = vsyncpa [#allocation4], 1
    %s845 = scalar_lea.sflag [#allocation4], 1
    %846 = vsyncpa %s845, 1
    %847 = vsyncpa [#allocation7], 1
    %848 = vsyncpa [#allocation5], 1
    %s849 = scalar_lea.sflag [#allocation5], 1
    %850 = vsyncpa %s849, 1

</llo_original>
